<compile_context>
chip_gen: v5e
topology: v5e:2x2
jax: 0.10.0
libtpu: 0.0.40
codegen_flags: <defaults>
</compile_context>

<pallas_src>
import jax
import jax.numpy as jnp
from jax import lax
from jax.experimental import pallas as pl
from jax.experimental.pallas import tpu as pltpu

LANE = 128


def sparse_vae_kernel(x_ref, w_ref, b_enc_ref, b_dec_ref, eps_ref,
                      xrec_ref, mu_ref, z_ref):
    x = x_ref[...]            # (TB, D)   f32
    w = w_ref[...]            # (Lp, D)   f32, rows >= L are zero
    b_enc = b_enc_ref[...]    # (1, Lp)
    b_dec = b_dec_ref[...]    # (1, D)
    eps = eps_ref[...]        # (TB, Lp), cols >= L are zero

    # encode: mu = x @ W^T + b_enc.  Contract over D on both operands so the
    # MXU consumes W directly without a transpose/relayout.
    mu = lax.dot_general(
        x, w,
        dimension_numbers=(((1,), (1,)), ((), ())),
        preferred_element_type=jnp.float32,
    ) + b_enc

    # reparameterize with log_var == 0:  std = 1  ->  z = mu + eps
    z = mu + eps

    # decode: x_recon = z @ W + b_dec (tied weights; zero-padded rows of W
    # contribute nothing).
    xrec = jnp.dot(z, w, preferred_element_type=jnp.float32) + b_dec

    mu_ref[...] = mu
    z_ref[...] = z
    xrec_ref[...] = xrec


def sparse_vae_forward(x, w, b_enc, b_dec, eps, *, tile_b=None):
    B, D = x.shape
    L, _ = w.shape

    # Pad the latent dim up to a lane-dense multiple of 128 so mu/z/eps are
    # stored with unmasked full-lane vector stores.
    Lp = max(LANE, ((L + LANE - 1) // LANE) * LANE)
    if Lp != L:
        w_p = jnp.zeros((Lp, D), w.dtype).at[:L, :].set(w)
        b_enc_p = jnp.zeros((Lp,), b_enc.dtype).at[:L].set(b_enc)
        eps_p = jnp.zeros((B, Lp), eps.dtype).at[:, :L].set(eps)
    else:
        w_p, b_enc_p, eps_p = w, b_enc, eps

    b_enc2 = b_enc_p.reshape(1, Lp)
    b_dec2 = b_dec.reshape(1, D)

    # Batch tiling: stream batch tiles through the pipeline; W/biases stay
    # resident.  Fall back to a single tile if the tile does not divide B.
    if tile_b is None:
        tile_b = B if B <= 256 else 256
    if B % tile_b != 0:
        tile_b = B
    grid = (B // tile_b,)

    out_shapes = (
        jax.ShapeDtypeStruct((B, D), jnp.float32),   # x_recon
        jax.ShapeDtypeStruct((B, Lp), jnp.float32),  # mu (lane-padded)
        jax.ShapeDtypeStruct((B, Lp), jnp.float32),  # z  (lane-padded)
    )

    cost = pl.CostEstimate(
        flops=2 * 2 * B * D * L,          # encode + decode matmuls
        transcendentals=0,
        bytes_accessed=4 * (B * D        # x in
                            + Lp * D     # W
                            + Lp + D     # biases
                            + B * Lp     # eps in
                            + B * D      # x_recon out
                            + 2 * B * Lp),  # mu, z out
    )

    fn = pl.pallas_call(
        sparse_vae_kernel,
        out_shape=out_shapes,
        grid_spec=pltpu.PrefetchScalarGridSpec(
            num_scalar_prefetch=0,
            grid=grid,
            in_specs=[
                pl.BlockSpec((tile_b, D), lambda i: (i, 0)),   # x tile
                pl.BlockSpec((Lp, D), lambda i: (0, 0)),       # W resident
                pl.BlockSpec((1, Lp), lambda i: (0, 0)),       # b_enc resident
                pl.BlockSpec((1, D), lambda i: (0, 0)),        # b_dec resident
                pl.BlockSpec((tile_b, Lp), lambda i: (i, 0)),  # eps tile
            ],
            out_specs=(
                pl.BlockSpec((tile_b, D), lambda i: (i, 0)),
                pl.BlockSpec((tile_b, Lp), lambda i: (i, 0)),
                pl.BlockSpec((tile_b, Lp), lambda i: (i, 0)),
            ),
        ),
        compiler_params=pltpu.CompilerParams(
            dimension_semantics=("parallel",),
        ),
        cost_estimate=cost,
    )

    xrec, mu_p, z_p = fn(x, w_p, b_enc2, b_dec2, eps_p)

    # Strip the lane padding and materialize the constant log_var in the
    # wrapper (XLA constant-folds it; no kernel store needed).
    mu = mu_p[:, :L]
    z = z_p[:, :L]
    log_var = jnp.zeros((B, L), jnp.float32)
    return xrec, mu, log_var, z


if __name__ == "__main__":
    # Small, MXU/vreg-friendly sizes; batch tiled 2x over the grid.
    B = 16
    input_dim = 128
    latent_dim = 32

    key = jax.random.PRNGKey(0)
    k_x, k_w, k_eps = jax.random.split(key, 3)

    x = jax.random.normal(k_x, (B, input_dim), dtype=jnp.float32)
    w = (jax.random.normal(k_w, (latent_dim, input_dim), dtype=jnp.float32)
         / jnp.sqrt(jnp.float32(input_dim)))
    b_enc = jnp.zeros((latent_dim,), dtype=jnp.float32)
    b_dec = jnp.zeros((input_dim,), dtype=jnp.float32)

    # TODO(synk): torch draws eps inside forward via randn_like; here it is
    # drawn host-side with jax.random for deterministic reproducibility.
    eps = jax.random.normal(k_eps, (B, latent_dim), dtype=jnp.float32)

    x_recon, mu, log_var, z = sparse_vae_forward(
        x, w, b_enc, b_dec, eps, tile_b=8)
    jax.block_until_ready((x_recon, mu, log_var, z))

    # Pure-JAX reference of the same math.
    mu_ref = x @ w.T + b_enc
    z_ref = mu_ref + eps
    xrec_ref = z_ref @ w + b_dec
    assert jnp.allclose(mu, mu_ref, atol=1e-5)
    assert jnp.allclose(z, z_ref, atol=1e-5)
    assert jnp.allclose(x_recon, xrec_ref, atol=1e-4)
    assert jnp.all(log_var == 0.0)
    assert log_var.shape == (B, latent_dim)

    print("KERNEL_OK")
</pallas_src>

<mosaic_0001>
module attributes {stable_mosaic.version = 11 : i64} {
  func.func @sparse_vae_kernel(%arg0: i32, %arg1: memref<8x128xf32, #tpu.memory_space<vmem>>, %arg2: memref<128x128xf32, #tpu.memory_space<vmem>>, %arg3: memref<1x128xf32, #tpu.memory_space<vmem>>, %arg4: memref<1x128xf32, #tpu.memory_space<vmem>>, %arg5: memref<8x128xf32, #tpu.memory_space<vmem>>, %arg6: memref<8x128xf32, #tpu.memory_space<vmem>>, %arg7: memref<8x128xf32, #tpu.memory_space<vmem>>, %arg8: memref<8x128xf32, #tpu.memory_space<vmem>>) attributes {dimension_semantics = [#tpu.dimension_semantics<parallel>], iteration_bounds = array<i64: 2>, scalar_prefetch = 0 : i64, scratch_operands = 0 : i64, tpu.core_type = #tpu.core_type<tc>, window_params = [{transform_indices = @transform_0, window_bounds = array<i64: 8, 128>}, {pipeline_mode = #tpu.pipeline_mode<synchronous>, transform_indices = @transform_1, window_bounds = array<i64: 128, 128>}, {pipeline_mode = #tpu.pipeline_mode<synchronous>, transform_indices = @transform_2, window_bounds = array<i64: 1, 128>}, {pipeline_mode = #tpu.pipeline_mode<synchronous>, transform_indices = @transform_3, window_bounds = array<i64: 1, 128>}, {transform_indices = @transform_4, window_bounds = array<i64: 8, 128>}, {transform_indices = @transform_5, window_bounds = array<i64: 8, 128>}, {transform_indices = @transform_6, window_bounds = array<i64: 8, 128>}, {transform_indices = @transform_7, window_bounds = array<i64: 8, 128>}]} {
    %c0 = arith.constant 0 : index
    %c0_0 = arith.constant 0 : index
    %0 = vector.load %arg1[%c0, %c0_0] : memref<8x128xf32, #tpu.memory_space<vmem>>, vector<8x128xf32>
    %c0_1 = arith.constant 0 : index
    %c0_2 = arith.constant 0 : index
    %1 = vector.load %arg2[%c0_1, %c0_2] : memref<128x128xf32, #tpu.memory_space<vmem>>, vector<128x128xf32>
    %c0_3 = arith.constant 0 : index
    %c0_4 = arith.constant 0 : index
    %2 = vector.load %arg3[%c0_3, %c0_4] : memref<1x128xf32, #tpu.memory_space<vmem>>, vector<1x128xf32>
    %c0_5 = arith.constant 0 : index
    %c0_6 = arith.constant 0 : index
    %3 = vector.load %arg4[%c0_5, %c0_6] : memref<1x128xf32, #tpu.memory_space<vmem>>, vector<1x128xf32>
    %c0_7 = arith.constant 0 : index
    %c0_8 = arith.constant 0 : index
    %4 = vector.load %arg5[%c0_7, %c0_8] : memref<8x128xf32, #tpu.memory_space<vmem>>, vector<8x128xf32>
    %cst = arith.constant dense<0.000000e+00> : vector<8x128xf32>
    %5 = tpu.matmul %0, %1, %cst {dimension_numbers = #tpu.dot_dimension_numbers<[1], [1], [0], [0], [0, 0, 1, 0], [], []>} : vector<8x128xf32>, vector<128x128xf32>, vector<8x128xf32> -> vector<8x128xf32>
    %6 = vector.broadcast %2 : vector<1x128xf32> to vector<8x128xf32>
    %7 = arith.addf %5, %6 : vector<8x128xf32>
    %8 = arith.addf %7, %4 : vector<8x128xf32>
    %cst_9 = arith.constant dense<0.000000e+00> : vector<8x128xf32>
    %9 = tpu.matmul %8, %1, %cst_9 {dimension_numbers = #tpu.dot_dimension_numbers<[1], [0], [0], [1], [0, 0, 1, 1], [], []>} : vector<8x128xf32>, vector<128x128xf32>, vector<8x128xf32> -> vector<8x128xf32>
    %10 = vector.broadcast %3 : vector<1x128xf32> to vector<8x128xf32>
    %11 = arith.addf %9, %10 : vector<8x128xf32>
    %c0_10 = arith.constant 0 : index
    %c0_11 = arith.constant 0 : index
    %12 = vector.load %arg7[%c0_10, %c0_11] : memref<8x128xf32, #tpu.memory_space<vmem>>, vector<8x128xf32>
    tpu.vector_store %arg7[%c0_10, %c0_11], %7 {strides = array<i32>} : memref<8x128xf32, #tpu.memory_space<vmem>>, vector<8x128xf32>,
    %c0_12 = arith.constant 0 : index
    %c0_13 = arith.constant 0 : index
    %13 = vector.load %arg8[%c0_12, %c0_13] : memref<8x128xf32, #tpu.memory_space<vmem>>, vector<8x128xf32>
    tpu.vector_store %arg8[%c0_12, %c0_13], %8 {strides = array<i32>} : memref<8x128xf32, #tpu.memory_space<vmem>>, vector<8x128xf32>,
    %c0_14 = arith.constant 0 : index
    %c0_15 = arith.constant 0 : index
    %14 = vector.load %arg6[%c0_14, %c0_15] : memref<8x128xf32, #tpu.memory_space<vmem>>, vector<8x128xf32>
    tpu.vector_store %arg6[%c0_14, %c0_15], %11 {strides = array<i32>} : memref<8x128xf32, #tpu.memory_space<vmem>>, vector<8x128xf32>,
    return
  }
  func.func @transform_0(%arg0: i32) -> (i32, i32) {
    %c0_i32 = arith.constant 0 : i32
    %c0_i32_0 = arith.constant 0 : i32
    return %arg0, %c0_i32 : i32, i32
  }
  func.func @transform_1(%arg0: i32) -> (i32, i32) {
    %c0_i32 = arith.constant 0 : i32
    %c0_i32_0 = arith.constant 0 : i32
    %c0_i32_1 = arith.constant 0 : i32
    return %c0_i32, %c0_i32_0 : i32, i32
  }
  func.func @transform_2(%arg0: i32) -> (i32, i32) {
    %c0_i32 = arith.constant 0 : i32
    %c0_i32_0 = arith.constant 0 : i32
    %c0_i32_1 = arith.constant 0 : i32
    return %c0_i32, %c0_i32_0 : i32, i32
  }
  func.func @transform_3(%arg0: i32) -> (i32, i32) {
    %c0_i32 = arith.constant 0 : i32
    %c0_i32_0 = arith.constant 0 : i32
    %c0_i32_1 = arith.constant 0 : i32
    return %c0_i32, %c0_i32_0 : i32, i32
  }
  func.func @transform_4(%arg0: i32) -> (i32, i32) {
    %c0_i32 = arith.constant 0 : i32
    %c0_i32_0 = arith.constant 0 : i32
    return %arg0, %c0_i32 : i32, i32
  }
  func.func @transform_5(%arg0: i32) -> (i32, i32) {
    %c0_i32 = arith.constant 0 : i32
    %c0_i32_0 = arith.constant 0 : i32
    return %arg0, %c0_i32 : i32, i32
  }
  func.func @transform_6(%arg0: i32) -> (i32, i32) {
    %c0_i32 = arith.constant 0 : i32
    %c0_i32_0 = arith.constant 0 : i32
    return %arg0, %c0_i32 : i32, i32
  }
  func.func @transform_7(%arg0: i32) -> (i32, i32) {
    %c0_i32 = arith.constant 0 : i32
    %c0_i32_0 = arith.constant 0 : i32
    return %arg0, %c0_i32 : i32, i32
  }
}

</mosaic_0001>

<llo_original>
// kernel: tpu_custom_call.1
$region0: #{tpu_custom_call.1}
  #allocation0 [shape = 'u32[]', space=smem, size = 0x4, offset = 0x4, fixed_abs, tag = 'smem constant byte address 0x4 - core index']
  #allocation1 [shape = 'u32[72,128]{1,0:T(1,128)}', space=vmem, size = 0x9000, scoped, tag = 'internal scratch']
  %s0 = inlined_call_operand.hbm [shape: f32[16,128], index: 0, kind: input, shape index: {}]
  %s1 = inlined_call_operand.hbm [shape: f32[128,128], index: 1, kind: input, shape index: {}]
  %s2 = inlined_call_operand.vmem [shape: f32[1,128], index: 2, kind: input, shape index: {}]
  %s3 = inlined_call_operand.vmem [shape: f32[1,128], index: 3, kind: input, shape index: {}]
  %s4 = inlined_call_operand.hbm [shape: f32[16,128], index: 4, kind: input, shape index: {}]
  %s5 = inlined_call_operand.hbm [shape: f32[16,128], index: 5, kind: output, shape index: {0}]
  %s6 = inlined_call_operand.hbm [shape: f32[16,128], index: 6, kind: output, shape index: {1}]
  %s7 = inlined_call_operand.hbm [shape: f32[16,128], index: 7, kind: output, shape index: {2}]
  %8 = xla_tuple %s5, %s6, %s7
  %s9 = sld [smem:[#allocation0]]
  $region81: #{tpu_custom_call.1} parent=0
    _
  %s11 = ssub.s32 1, %s9
  %s12 = scalar_select 0, %s11, %s9
  $region1: #{tpu_custom_call.1} parent=0
    #allocation2 [shape = 'u8[8192]{0}', space=vmem, size = 0x2000, scoped, tag = 'input window, operand 0']
    #allocation3 [shape = 's32[2]{0}', space=sflag, size = 0x8, scoped, tag = 'scoped memory for tpu_custom_call.1']
    #allocation4 [shape = 's32[2]{0}', space=sflag, size = 0x8, scoped, tag = 'scoped memory for tpu_custom_call.1']
    #allocation5 [shape = 'u8[65536]{0}', space=vmem, size = 0x10000, scoped, tag = 'input window, operand 1, single buffered']
    #allocation6 [shape = 's32[1]{0}', space=sflag, size = 0x4, scoped, tag = 'scoped memory for tpu_custom_call.1']
    #allocation7 [shape = 'u8[8192]{0}', space=vmem, size = 0x2000, scoped, tag = 'input window, operand 4']
    #allocation8 [shape = 'u8[8192]{0}', space=vmem, size = 0x2000, scoped, tag = 'output window, operand 0']
    #allocation9 [shape = 'u8[8192]{0}', space=vmem, size = 0x2000, scoped, tag = 'output window, operand 1']
    #allocation10 [shape = 's32[2]{0}', space=sflag, size = 0x8, scoped, tag = 'scoped memory for tpu_custom_call.1']
    #allocation11 [shape = 'u8[8192]{0}', space=vmem, size = 0x2000, scoped, tag = 'output window, operand 2']
    %13 = vsyncpa [#allocation3], 0
    %s14 = scalar_lea.sflag [#allocation3], 1
    %15 = vsyncpa %s14, 0
    %16 = vsyncpa [#allocation6], 0
    %17 = vsyncpa [#allocation4], 0
    %s18 = scalar_lea.sflag [#allocation4], 1
    %19 = vsyncpa %s18, 0
    %20 = vsyncpa [#allocation10], 0
    %s21 = scalar_lea.sflag [#allocation10], 1
    %22 = vsyncpa %s21, 0
    loop: start=0, step=1, limit=4
    $region2: #{tpu_custom_call.1} parent=1 // loop_pre_header
      _
    $region3: #{tpu_custom_call.1} parent=1 // loop_header
      %s24 = sphi 0, %s28
      %p25 = scmp.ge.s32.totalorder %s24, 4
      %s34 = sphi 0, %s36
      %s37 = sphi 0, %s34
      %s38 = sphi 0, %s37
      %s54 = sphi 0, %s38
      %s58 = sphi 0, %s58
      %s60 = sphi 0, %s58
      %s61 = sphi 0, %s60
      %s75 = sphi 0, %s61
      %s79 = sphi 0, %s79
      %s81 = sphi 0, %s79
      %s82 = sphi 0, %s81
      %s96 = sphi 0, %s82
      %s100 = sphi 0, %s100
      %s102 = sphi 0, %s100
      %s103 = sphi 0, %s102
      %s117 = sphi 0, %s103
      %s123 = sphi 0, %s125
      %s126 = sphi 0, %s123
      %s127 = sphi 0, %s126
      %s143 = sphi 0, %s127
      %s149 = sphi 0, %s151
      %s152 = sphi 0, %s149
      %s153 = sphi 0, %s152
      %s169 = sphi 0, %s153
      %s175 = sphi 0, %s177
      %s178 = sphi 0, %s175
      %s179 = sphi 0, %s178
      %s195 = sphi 0, %s179
      %s201 = sphi 0, %s203
      %s204 = sphi 0, %s201
      %s205 = sphi 0, %s204
      %s221 = sphi 0, %s205
    $region4: #{tpu_custom_call.1} parent=1 // loop_header_branch
      %27 = sbr.rel (%p25) target = $region8
    $region5: #{tpu_custom_call.1} parent=1 // loop_body
      %s29 = ssub.s32 %s24, 1
      %s30 = ssub.s32 %s24, 2
      %s31 = sadd.s32 %s24, 1
      %s32 = ssub.s32 %s24, %s31
      %p33 = scmp.eq.s32.totalorder %s32, 0
      %s35 = sadd.s32 %s34, 1
      %s36 = scalar_select %p33, %s34, %s35
      %p39 = pneg %p33
      %p40 = scmp.eq.s32.totalorder %s24, 1
      %p41 = por %p39, %p40
      %p42 = scmp.ne.s32.totalorder %s34, %s37
      %p43 = scmp.eq.s32.totalorder %s24, 0
      %p44 = por %p42, %p43
      %p45 = scmp.ne.s32.totalorder %s34, %s37
      %p46 = scmp.eq.s32.totalorder %s29, 1
      %p47 = por %p45, %p46
      %p48 = scmp.ne.s32.totalorder %s37, %s38
      %p49 = scmp.eq.s32.totalorder %s29, 0
      %p50 = por %p48, %p49
      %p51 = scmp.ne.s32.totalorder %s37, %s38
      %p52 = scmp.eq.s32.totalorder %s30, 1
      %p53 = por %p51, %p52
      %p55 = scmp.ne.s32.totalorder %s38, %s54
      %p56 = scmp.eq.s32.totalorder %s30, 0
      %p57 = por %p55, %p56
      %s59 = sadd.s32 %s58, 1
      %p62 = scmp.eq.s32.totalorder %s24, 1
      %p63 = scmp.ne.s32.totalorder %s58, %s60
      %p64 = scmp.eq.s32.totalorder %s24, 0
      %p65 = por %p63, %p64
      %p66 = scmp.ne.s32.totalorder %s58, %s60
      %p67 = scmp.eq.s32.totalorder %s29, 1
      %p68 = por %p66, %p67
      %p69 = scmp.ne.s32.totalorder %s60, %s61
      %p70 = scmp.eq.s32.totalorder %s29, 0
      %p71 = por %p69, %p70
      %p72 = scmp.ne.s32.totalorder %s60, %s61
      %p73 = scmp.eq.s32.totalorder %s30, 1
      %p74 = por %p72, %p73
      %p76 = scmp.ne.s32.totalorder %s61, %s75
      %p77 = scmp.eq.s32.totalorder %s30, 0
      %p78 = por %p76, %p77
      %s80 = sadd.s32 %s79, 1
      %p83 = scmp.eq.s32.totalorder %s24, 1
      %p84 = scmp.ne.s32.totalorder %s79, %s81
      %p85 = scmp.eq.s32.totalorder %s24, 0
      %p86 = por %p84, %p85
      %p87 = scmp.ne.s32.totalorder %s79, %s81
      %p88 = scmp.eq.s32.totalorder %s29, 1
      %p89 = por %p87, %p88
      %p90 = scmp.ne.s32.totalorder %s81, %s82
      %p91 = scmp.eq.s32.totalorder %s29, 0
      %p92 = por %p90, %p91
      %p93 = scmp.ne.s32.totalorder %s81, %s82
      %p94 = scmp.eq.s32.totalorder %s30, 1
      %p95 = por %p93, %p94
      %p97 = scmp.ne.s32.totalorder %s82, %s96
      %p98 = scmp.eq.s32.totalorder %s30, 0
      %p99 = por %p97, %p98
      %s101 = sadd.s32 %s100, 1
      %p104 = scmp.eq.s32.totalorder %s24, 1
      %p105 = scmp.ne.s32.totalorder %s100, %s102
      %p106 = scmp.eq.s32.totalorder %s24, 0
      %p107 = por %p105, %p106
      %p108 = scmp.ne.s32.totalorder %s100, %s102
      %p109 = scmp.eq.s32.totalorder %s29, 1
      %p110 = por %p108, %p109
      %p111 = scmp.ne.s32.totalorder %s102, %s103
      %p112 = scmp.eq.s32.totalorder %s29, 0
      %p113 = por %p111, %p112
      %p114 = scmp.ne.s32.totalorder %s102, %s103
      %p115 = scmp.eq.s32.totalorder %s30, 1
      %p116 = por %p114, %p115
      %p118 = scmp.ne.s32.totalorder %s103, %s117
      %p119 = scmp.eq.s32.totalorder %s30, 0
      %p120 = por %p118, %p119
      %s121 = ssub.s32 %s24, %s31
      %p122 = scmp.eq.s32.totalorder %s121, 0
      %s124 = sadd.s32 %s123, 1
      %s125 = scalar_select %p122, %s123, %s124
      %p128 = pneg %p122
      %p129 = scmp.eq.s32.totalorder %s24, 1
      %p130 = por %p128, %p129
      %p131 = scmp.ne.s32.totalorder %s123, %s126
      %p132 = scmp.eq.s32.totalorder %s24, 0
      %p133 = por %p131, %p132
      %p134 = scmp.ne.s32.totalorder %s123, %s126
      %p135 = scmp.eq.s32.totalorder %s29, 1
      %p136 = por %p134, %p135
      %p137 = scmp.ne.s32.totalorder %s126, %s127
      %p138 = scmp.eq.s32.totalorder %s29, 0
      %p139 = por %p137, %p138
      %p140 = scmp.ne.s32.totalorder %s126, %s127
      %p141 = scmp.eq.s32.totalorder %s30, 1
      %p142 = por %p140, %p141
      %p144 = scmp.ne.s32.totalorder %s127, %s143
      %p145 = scmp.eq.s32.totalorder %s30, 0
      %p146 = por %p144, %p145
      %s147 = ssub.s32 %s24, %s31
      %p148 = scmp.eq.s32.totalorder %s147, 0
      %s150 = sadd.s32 %s149, 1
      %s151 = scalar_select %p148, %s149, %s150
      %p154 = pneg %p148
      %p155 = scmp.eq.s32.totalorder %s24, 1
      %p156 = por %p154, %p155
      %p157 = scmp.ne.s32.totalorder %s149, %s152
      %p158 = scmp.eq.s32.totalorder %s24, 0
      %p159 = por %p157, %p158
      %p160 = scmp.ne.s32.totalorder %s149, %s152
      %p161 = scmp.eq.s32.totalorder %s29, 1
      %p162 = por %p160, %p161
      %p163 = scmp.ne.s32.totalorder %s152, %s153
      %p164 = scmp.eq.s32.totalorder %s29, 0
      %p165 = por %p163, %p164
      %p166 = scmp.ne.s32.totalorder %s152, %s153
      %p167 = scmp.eq.s32.totalorder %s30, 1
      %p168 = por %p166, %p167
      %p170 = scmp.ne.s32.totalorder %s153, %s169
      %p171 = scmp.eq.s32.totalorder %s30, 0
      %p172 = por %p170, %p171
      %s173 = ssub.s32 %s24, %s31
      %p174 = scmp.eq.s32.totalorder %s173, 0
      %s176 = sadd.s32 %s175, 1
      %s177 = scalar_select %p174, %s175, %s176
      %p180 = pneg %p174
      %p181 = scmp.eq.s32.totalorder %s24, 1
      %p182 = por %p180, %p181
      %p183 = scmp.ne.s32.totalorder %s175, %s178
      %p184 = scmp.eq.s32.totalorder %s24, 0
      %p185 = por %p183, %p184
      %p186 = scmp.ne.s32.totalorder %s175, %s178
      %p187 = scmp.eq.s32.totalorder %s29, 1
      %p188 = por %p186, %p187
      %p189 = scmp.ne.s32.totalorder %s178, %s179
      %p190 = scmp.eq.s32.totalorder %s29, 0
      %p191 = por %p189, %p190
      %p192 = scmp.ne.s32.totalorder %s178, %s179
      %p193 = scmp.eq.s32.totalorder %s30, 1
      %p194 = por %p192, %p193
      %p196 = scmp.ne.s32.totalorder %s179, %s195
      %p197 = scmp.eq.s32.totalorder %s30, 0
      %p198 = por %p196, %p197
      %s199 = ssub.s32 %s24, %s31
      %p200 = scmp.eq.s32.totalorder %s199, 0
      %s202 = sadd.s32 %s201, 1
      %s203 = scalar_select %p200, %s201, %s202
      %p206 = pneg %p200
      %p207 = scmp.eq.s32.totalorder %s24, 1
      %p208 = por %p206, %p207
      %p209 = scmp.ne.s32.totalorder %s201, %s204
      %p210 = scmp.eq.s32.totalorder %s24, 0
      %p211 = por %p209, %p210
      %p212 = scmp.ne.s32.totalorder %s201, %s204
      %p213 = scmp.eq.s32.totalorder %s29, 1
      %p214 = por %p212, %p213
      %p215 = scmp.ne.s32.totalorder %s204, %s205
      %p216 = scmp.eq.s32.totalorder %s29, 0
      %p217 = por %p215, %p216
      %p218 = scmp.ne.s32.totalorder %s204, %s205
      %p219 = scmp.eq.s32.totalorder %s30, 1
      %p220 = por %p218, %p219
      %p222 = scmp.ne.s32.totalorder %s205, %s221
      %p223 = scmp.eq.s32.totalorder %s30, 0
      %p224 = por %p222, %p223
      %p225 = scmp.le.s32.totalorder 1, %s24
      %p226 = scmp.lt.s32.totalorder %s24, 3
      %p227 = pnand %p225, %p226
      %p228 = pneg %p227
      // Predicated region
      $region9: #{tpu_custom_call.1} parent=5 // pred_check
        _
      $region10: #{tpu_custom_call.1} parent=5 // pred_check_branch
        %230 = sbr.rel (%p227) target = $region12
      $region11: #{tpu_custom_call.1} parent=5 // pred_region
        %s231 = ssub.s32 %s24, 1
        // Predicated region
        $region13: #{tpu_custom_call.1} parent=11 // pred_check
          %p232 = pneg %p71
        $region14: #{tpu_custom_call.1} parent=11 // pred_check_branch
          %234 = sbr.rel (%p232) target = $region16
        $region15: #{tpu_custom_call.1} parent=11 // pred_region
          %236 = vsyncadd [#allocation6], 0
          %s237 = sshll.u32 %s1, 4
          %s238 = int_to_ptr.hbm [resolvable:$true] %s237
          %s239 = sshll.u32 [#allocation5], 4
          %s240 = int_to_ptr.vmem [resolvable:$true] %s239
          %245 = dma.hbm_to_vmem [thread:$0]  %s238, 2048, %s240, [#allocation6], 128, 128, 8
        $region16: #{tpu_custom_call.1} parent=11 // pred_fallthru
          _
        // Predicated region
        $region17: #{tpu_custom_call.1} parent=11 // pred_check
          %p246 = pneg %p92
        $region18: #{tpu_custom_call.1} parent=11 // pred_check_branch
          %248 = sbr.rel (%p246) target = $region20
        $region19: #{tpu_custom_call.1} parent=11 // pred_region
          _
        $region20: #{tpu_custom_call.1} parent=11 // pred_fallthru
          _
        // Predicated region
        $region21: #{tpu_custom_call.1} parent=11 // pred_check
          %p249 = pneg %p113
        $region22: #{tpu_custom_call.1} parent=11 // pred_check_branch
          %251 = sbr.rel (%p249) target = $region24
        $region23: #{tpu_custom_call.1} parent=11 // pred_region
          _
        $region24: #{tpu_custom_call.1} parent=11 // pred_fallthru
          _
      $region12: #{tpu_custom_call.1} parent=5 // pred_fallthru
        _
      %p252 = scmp.lt.s32.totalorder %s24, 2
      // Predicated region
      $region25: #{tpu_custom_call.1} parent=5 // pred_check
        %p253 = pneg %p252
      $region26: #{tpu_custom_call.1} parent=5 // pred_check_branch
        %255 = sbr.rel (%p253) target = $region28
      $region27: #{tpu_custom_call.1} parent=5 // pred_region
        // Predicated region
        $region29: #{tpu_custom_call.1} parent=27 // pred_check
          %p256 = pneg %p44
        $region30: #{tpu_custom_call.1} parent=27 // pred_check_branch
          %258 = sbr.rel (%p256) target = $region32
        $region31: #{tpu_custom_call.1} parent=27 // pred_region
          %s259 = sand.u32 %s24, 1
          %s260 = scalar_lea.sflag [#allocation3], %s259
          %s261 = sand.u32 %s34, 1
          %s262 = smul.addr %s261, 8
          %s263 = scalar_lea.vmem [#allocation2], %s262
          %265 = vsyncadd %s260, 0
          %s266 = smul.addr %s24, 8
          %s267 = scalar_lea.hbm %s0, %s266
          %s269 = sshll.u32 %s267, 4
          %s270 = int_to_ptr.hbm [resolvable:$true] %s269
          %s271 = sshll.u32 %s263, 4
          %s272 = int_to_ptr.vmem [resolvable:$true] %s271
          %274 = dma.hbm_to_vmem [thread:$0]  %s270, 128, %s272, %s260
        $region32: #{tpu_custom_call.1} parent=27 // pred_fallthru
          _
        // Predicated region
        $region33: #{tpu_custom_call.1} parent=27 // pred_check
          %p275 = pneg %p133
        $region34: #{tpu_custom_call.1} parent=27 // pred_check_branch
          %277 = sbr.rel (%p275) target = $region36
        $region35: #{tpu_custom_call.1} parent=27 // pred_region
          %s278 = sand.u32 %s24, 1
          %s279 = scalar_lea.sflag [#allocation3], %s278
          %s280 = sand.u32 %s123, 1
          %s281 = smul.addr %s280, 8
          %s282 = scalar_lea.vmem [#allocation7], %s281
          %284 = vsyncadd %s279, 0
          %s285 = smul.addr %s24, 8
          %s286 = scalar_lea.hbm %s4, %s285
          %s288 = sshll.u32 %s286, 4
          %s289 = int_to_ptr.hbm [resolvable:$true] %s288
          %s290 = sshll.u32 %s282, 4
          %s291 = int_to_ptr.vmem [resolvable:$true] %s290
          %293 = dma.hbm_to_vmem [thread:$0]  %s289, 128, %s291, %s279
        $region36: #{tpu_custom_call.1} parent=27 // pred_fallthru
          _
      $region28: #{tpu_custom_call.1} parent=5 // pred_fallthru
        _
      %p294 = scmp.le.s32.totalorder 1, %s24
      %p295 = scmp.lt.s32.totalorder %s24, 3
      %p296 = pnand %p294, %p295
      %p297 = pneg %p296
      // Predicated region
      $region37: #{tpu_custom_call.1} parent=5 // pred_check
        _
      $region38: #{tpu_custom_call.1} parent=5 // pred_check_branch
        %299 = sbr.rel (%p296) target = $region40
      $region39: #{tpu_custom_call.1} parent=5 // pred_region
        %s300 = ssub.s32 %s24, 1
        %s301 = sand.u32 %s29, 1
        %s302 = scalar_lea.sflag [#allocation3], %s301
        %s303 = sand.u32 %s37, 1
        %s304 = smul.addr %s303, 8
        %s305 = scalar_lea.vmem [#allocation2], %s304
        // Predicated region
        $region41: #{tpu_custom_call.1} parent=39 // pred_check
          %p306 = pneg %p50
        $region42: #{tpu_custom_call.1} parent=39 // pred_check_branch
          %308 = sbr.rel (%p306) target = $region44
        $region43: #{tpu_custom_call.1} parent=39 // pred_region
          %310 = dma.done %s302, 128
        $region44: #{tpu_custom_call.1} parent=39 // pred_fallthru
          _
        // Predicated region
        $region45: #{tpu_custom_call.1} parent=39 // pred_check
          %p311 = pneg %p71
        $region46: #{tpu_custom_call.1} parent=39 // pred_check_branch
          %313 = sbr.rel (%p311) target = $region48
        $region47: #{tpu_custom_call.1} parent=39 // pred_region
          %315 = dma.done [#allocation6], 2048
        $region48: #{tpu_custom_call.1} parent=39 // pred_fallthru
          _
        %s316 = sand.u32 %s29, 1
        %s317 = scalar_lea.sflag [#allocation3], %s316
        %s318 = sand.u32 %s126, 1
        %s319 = smul.addr %s318, 8
        %s320 = scalar_lea.vmem [#allocation7], %s319
        // Predicated region
        $region49: #{tpu_custom_call.1} parent=39 // pred_check
          %p321 = pneg %p139
        $region50: #{tpu_custom_call.1} parent=39 // pred_check_branch
          %323 = sbr.rel (%p321) target = $region52
        $region51: #{tpu_custom_call.1} parent=39 // pred_region
          %325 = dma.done %s317, 128
        $region52: #{tpu_custom_call.1} parent=39 // pred_fallthru
          _
        %s326 = sand.u32 %s29, 1
        %s327 = scalar_lea.sflag [#allocation3], %s326
        %s328 = sand.u32 %s37, 1
        %s329 = smul.addr %s328, 8
        %s330 = scalar_lea.vmem [#allocation2], %s329
        %p331 = pneg %p50
        %p332 = pneg %p47
        %p333 = pneg %p71
        %p334 = pneg %p68
        %p335 = pneg %p92
        %p336 = pneg %p89
        %p337 = pneg %p113
        %p338 = pneg %p110
        %s339 = sand.u32 %s29, 1
        %s340 = scalar_lea.sflag [#allocation3], %s339
        %s341 = sand.u32 %s126, 1
        %s342 = smul.addr %s341, 8
        %s343 = scalar_lea.vmem [#allocation7], %s342
        %p344 = pneg %p139
        %p345 = pneg %p136
        %p346 = pneg %p165
        %p347 = pneg %p162
        %s348 = sand.u32 %s152, 1
        %s349 = scalar_lea.sflag [#allocation4], %s348
        %s350 = sand.u32 %s152, 1
        %s351 = smul.addr %s350, 8
        %s352 = scalar_lea.vmem [#allocation8], %s351
        %p353 = pneg %p191
        %p354 = pneg %p188
        %s355 = sand.u32 %s29, 1
        %s356 = scalar_lea.sflag [#allocation10], %s355
        %s357 = sand.u32 %s178, 1
        %s358 = smul.addr %s357, 8
        %s359 = scalar_lea.vmem [#allocation9], %s358
        %p360 = pneg %p217
        %p361 = pneg %p214
        %s362 = sand.u32 %s29, 1
        %s363 = scalar_lea.sflag [#allocation10], %s362
        %s364 = sand.u32 %s204, 1
        %s365 = smul.addr %s364, 8
        %s366 = scalar_lea.vmem [#allocation11], %s365
        %v367 = vld [vmem:[%s305] sm:$0xff]
        %v368 = vld [vmem:[#allocation5] sm:$0xff]
        %v369 = vld [vmem:[#allocation5 + $0x8] sm:$0xff]
        %v370 = vld [vmem:[#allocation5 + $0x10] sm:$0xff]
        %v371 = vld [vmem:[#allocation5 + $0x18] sm:$0xff]
        %v372 = vld [vmem:[#allocation5 + $0x20] sm:$0xff]
        %v373 = vld [vmem:[#allocation5 + $0x28] sm:$0xff]
        %v374 = vld [vmem:[#allocation5 + $0x30] sm:$0xff]
        %v375 = vld [vmem:[#allocation5 + $0x38] sm:$0xff]
        %v376 = vld [vmem:[#allocation5 + $0x40] sm:$0xff]
        %v377 = vld [vmem:[#allocation5 + $0x48] sm:$0xff]
        %v378 = vld [vmem:[#allocation5 + $0x50] sm:$0xff]
        %v379 = vld [vmem:[#allocation5 + $0x58] sm:$0xff]
        %v380 = vld [vmem:[#allocation5 + $0x60] sm:$0xff]
        %v381 = vld [vmem:[#allocation5 + $0x68] sm:$0xff]
        %v382 = vld [vmem:[#allocation5 + $0x70] sm:$0xff]
        %v383 = vld [vmem:[#allocation5 + $0x78] sm:$0xff]
        %v384 = vld [vmem:[%s2] sm:$0x1]
        %v385 = vld [vmem:[%s3] sm:$0x1]
        %v386 = vld [vmem:[%s320] sm:$0xff]
        %v388 = vperm.slane %v384, 0
        %390 = vmatpush.xpose.msra.mxu0 %v383
        %391 = vmatpush.xpose.msra.mxu0 %v382
        %392 = vmatpush.xpose.msra.mxu0 %v381
        %393 = vmatpush.xpose.msra.mxu0 %v380
        %394 = vmatpush.xpose.msra.mxu0 %v379
        %395 = vmatpush.xpose.msra.mxu0 %v378
        %396 = vmatpush.xpose.msra.mxu0 %v377
        %397 = vmatpush.xpose.msra.mxu0 %v376
        %398 = vmatpush.xpose.msra.mxu0 %v375
        %399 = vmatpush.xpose.msra.mxu0 %v374
        %400 = vmatpush.xpose.msra.mxu0 %v373
        %401 = vmatpush.xpose.msra.mxu0 %v372
        %402 = vmatpush.xpose.msra.mxu0 %v371
        %403 = vmatpush.xpose.msra.mxu0 %v370
        %404 = vmatpush.xpose.msra.mxu0 %v369
        %405 = vmatpush.xpose.msra.mxu0 %v368
        %406 = vmatmul.f32.gmra.mxu0 %v367
        %v407 = vpop.f32.mrf.mxu0
        %v408 = vadd.f32 %v388, %v407
        %409 = vdwg.mxu0
        %v410 = vadd.f32 %v408, %v386
        %v412 = vperm.slane %v385, 0
        %414 = vmatpush.msra.mxu0 %v383
        %415 = vmatpush.msra.mxu0 %v382
        %416 = vmatpush.msra.mxu0 %v381
        %417 = vmatpush.msra.mxu0 %v380
        %418 = vmatpush.msra.mxu0 %v379
        %419 = vmatpush.msra.mxu0 %v378
        %420 = vmatpush.msra.mxu0 %v377
        %421 = vmatpush.msra.mxu0 %v376
        %422 = vmatpush.msra.mxu0 %v375
        %423 = vmatpush.msra.mxu0 %v374
        %424 = vmatpush.msra.mxu0 %v373
        %425 = vmatpush.msra.mxu0 %v372
        %426 = vmatpush.msra.mxu0 %v371
        %427 = vmatpush.msra.mxu0 %v370
        %428 = vmatpush.msra.mxu0 %v369
        %429 = vmatpush.msra.mxu0 %v368
        %430 = vmatmul.f32.gmra.mxu0 %v410
        %v431 = vpop.f32.mrf.mxu0
        %v432 = vadd.f32 %v412, %v431
        %433 = vdwg.mxu0
        %434 = vst [vmem:[%s359] sm:$0xff] %v408
        %435 = vst [vmem:[%s366] sm:$0xff] %v410
        %436 = vst [vmem:[%s352] sm:$0xff] %v432
        %s437 = sand.u32 %s152, 1
        %s438 = scalar_lea.sflag [#allocation4], %s437
        %s439 = sand.u32 %s152, 1
        %s440 = smul.addr %s439, 8
        %s441 = scalar_lea.vmem [#allocation8], %s440
        %s442 = sand.u32 %s29, 1
        %s443 = scalar_lea.sflag [#allocation10], %s442
        %s444 = sand.u32 %s178, 1
        %s445 = smul.addr %s444, 8
        %s446 = scalar_lea.vmem [#allocation9], %s445
        %s447 = sand.u32 %s29, 1
        %s448 = scalar_lea.sflag [#allocation10], %s447
        %s449 = sand.u32 %s204, 1
        %s450 = smul.addr %s449, 8
        %s451 = scalar_lea.vmem [#allocation11], %s450
        // Predicated region
        $region53: #{tpu_custom_call.1} parent=39 // pred_check
          %p452 = pneg %p162
        $region54: #{tpu_custom_call.1} parent=39 // pred_check_branch
          %454 = sbr.rel (%p452) target = $region56
        $region55: #{tpu_custom_call.1} parent=39 // pred_region
          %456 = vsyncadd %s438, 0
          %s457 = smul.addr %s29, 8
          %s458 = scalar_lea.hbm %s5, %s457
          %s460 = sshll.u32 %s441, 4
          %s461 = int_to_ptr.vmem [resolvable:$true] %s460
          %s462 = sshll.u32 %s458, 4
          %s463 = int_to_ptr.hbm [resolvable:$true] %s462
          %465 = dma.vmem_to_hbm [thread:$0]  %s461, 128, %s463, %s438
        $region56: #{tpu_custom_call.1} parent=39 // pred_fallthru
          _
        // Predicated region
        $region57: #{tpu_custom_call.1} parent=39 // pred_check
          %p466 = pneg %p188
        $region58: #{tpu_custom_call.1} parent=39 // pred_check_branch
          %468 = sbr.rel (%p466) target = $region60
        $region59: #{tpu_custom_call.1} parent=39 // pred_region
          %470 = vsyncadd %s443, 0
          %s471 = smul.addr %s29, 8
          %s472 = scalar_lea.hbm %s6, %s471
          %s474 = sshll.u32 %s446, 4
          %s475 = int_to_ptr.vmem [resolvable:$true] %s474
          %s476 = sshll.u32 %s472, 4
          %s477 = int_to_ptr.hbm [resolvable:$true] %s476
          %479 = dma.vmem_to_hbm [thread:$0]  %s475, 128, %s477, %s443
        $region60: #{tpu_custom_call.1} parent=39 // pred_fallthru
          _
        // Predicated region
        $region61: #{tpu_custom_call.1} parent=39 // pred_check
          %p480 = pneg %p214
        $region62: #{tpu_custom_call.1} parent=39 // pred_check_branch
          %482 = sbr.rel (%p480) target = $region64
        $region63: #{tpu_custom_call.1} parent=39 // pred_region
          %484 = vsyncadd %s448, 0
          %s485 = smul.addr %s29, 8
          %s486 = scalar_lea.hbm %s7, %s485
          %s488 = sshll.u32 %s451, 4
          %s489 = int_to_ptr.vmem [resolvable:$true] %s488
          %s490 = sshll.u32 %s486, 4
          %s491 = int_to_ptr.hbm [resolvable:$true] %s490
          %493 = dma.vmem_to_hbm [thread:$0]  %s489, 128, %s491, %s448
        $region64: #{tpu_custom_call.1} parent=39 // pred_fallthru
          _
      $region40: #{tpu_custom_call.1} parent=5 // pred_fallthru
        _
      %p494 = scmp.le.s32.totalorder 2, %s24
      // Predicated region
      $region65: #{tpu_custom_call.1} parent=5 // pred_check
        %p495 = pneg %p494
      $region66: #{tpu_custom_call.1} parent=5 // pred_check_branch
        %497 = sbr.rel (%p495) target = $region68
      $region67: #{tpu_custom_call.1} parent=5 // pred_region
        %s498 = ssub.s32 %s24, 2
        // Predicated region
        $region69: #{tpu_custom_call.1} parent=67 // pred_check
          %p499 = pneg %p168
        $region70: #{tpu_custom_call.1} parent=67 // pred_check_branch
          %501 = sbr.rel (%p499) target = $region72
        $region71: #{tpu_custom_call.1} parent=67 // pred_region
          %s502 = sand.u32 %s153, 1
          %s503 = scalar_lea.sflag [#allocation4], %s502
          %s504 = sand.u32 %s153, 1
          %s505 = smul.addr %s504, 8
          %s506 = scalar_lea.vmem [#allocation8], %s505
          %508 = dma.done %s503, 128
        $region72: #{tpu_custom_call.1} parent=67 // pred_fallthru
          _
        // Predicated region
        $region73: #{tpu_custom_call.1} parent=67 // pred_check
          %p509 = pneg %p194
        $region74: #{tpu_custom_call.1} parent=67 // pred_check_branch
          %511 = sbr.rel (%p509) target = $region76
        $region75: #{tpu_custom_call.1} parent=67 // pred_region
          %s512 = sand.u32 %s30, 1
          %s513 = scalar_lea.sflag [#allocation10], %s512
          %s514 = sand.u32 %s179, 1
          %s515 = smul.addr %s514, 8
          %s516 = scalar_lea.vmem [#allocation9], %s515
          %518 = dma.done %s513, 128
        $region76: #{tpu_custom_call.1} parent=67 // pred_fallthru
          _
        // Predicated region
        $region77: #{tpu_custom_call.1} parent=67 // pred_check
          %p519 = pneg %p220
        $region78: #{tpu_custom_call.1} parent=67 // pred_check_branch
          %521 = sbr.rel (%p519) target = $region80
        $region79: #{tpu_custom_call.1} parent=67 // pred_region
          %s522 = sand.u32 %s30, 1
          %s523 = scalar_lea.sflag [#allocation10], %s522
          %s524 = sand.u32 %s205, 1
          %s525 = smul.addr %s524, 8
          %s526 = scalar_lea.vmem [#allocation11], %s525
          %528 = dma.done %s523, 128
        $region80: #{tpu_custom_call.1} parent=67 // pred_fallthru
          _
      $region68: #{tpu_custom_call.1} parent=5 // pred_fallthru
        _
    $region6: #{tpu_custom_call.1} parent=1 // loop_footer
      %s28 = sadd.s32 1, %s24
    $region7: #{tpu_custom_call.1} parent=1 // loop_footer_branch
      %23 = sbr.rel target = $region3
    $region8: #{tpu_custom_call.1} parent=1 // loop_exit
      _
    %529 = vsyncpa [#allocation3], 1
    %s530 = scalar_lea.sflag [#allocation3], 1
    %531 = vsyncpa %s530, 1
    %532 = vsyncpa [#allocation6], 1
    %533 = vsyncpa [#allocation4], 1
    %s534 = scalar_lea.sflag [#allocation4], 1
    %535 = vsyncpa %s534, 1
    %536 = vsyncpa [#allocation10], 1
    %s537 = scalar_lea.sflag [#allocation10], 1
    %538 = vsyncpa %s537, 1

</llo_original>
